<compile_context>
chip_gen: v7x
topology: tpu7x:2x2x1
jax: 0.10.0
libtpu: 0.0.40
codegen_flags: <defaults>
</compile_context>

<pallas_src>
import functools

import jax
import jax.numpy as jnp
from jax.experimental import pallas as pl
from jax.experimental.pallas import tpu as pltpu

# Autoencoder layer widths (from AE_84_60_40_20_6)
DIMS = [84, 60, 40, 20, 6, 20, 40, 60, 84]
N_LAYERS = len(DIMS) - 1
NEG_SLOPE = 0.01
LANE = 128                      # padded feature width (one full lane tile)

IN_DIM = DIMS[0]                # 84
RECON_DIM = DIMS[-1]            # 84
LATENT_DIM = DIMS[4]            # 6
LATENT_LAYER = 3                # latent = post-activation of layer index 3


def _round_up(n, m):
    return ((n + m - 1) // m) * m


def _grid_params(B, block_b):
    """Even-split batch tiling: <8 rows of padding per tile; >=2 steps for v7x."""
    n_steps = pl.cdiv(B, block_b)
    if B > 128:
        n_steps = max(n_steps, 2)       # v7x has 2 TensorCores; give each a tile
    bb = _round_up(pl.cdiv(B, n_steps), 8)
    return n_steps, bb, n_steps * bb


def ae_kernel(x_ref, w0_ref, w_ref, b_ref, out_ref):
    """Fused AE forward on one batch tile.

    x_ref:   (bb, 84)  f32 inputs (no feature padding).
    w0_ref:  (84, 128) layer-0 weight, zero-padded along the out axis.
    w_ref:   (7, 128, 128) zero-padded weights for layers 1..7, (in, out) layout.
    b_ref:   (8, 128)  zero-padded biases (always f32).
    out_ref: (bb, 128) fused slab: lanes 0:84 = recon (x8), 84:90 = latent (x4).
    """
    cdt = w0_ref.dtype            # bf16 fast path or f32 exact path

    # Layer 0: contract K=84 directly so x never needs lane padding in HBM.
    h = jnp.dot(x_ref[...].astype(cdt), w0_ref[...],
                preferred_element_type=jnp.float32)
    h = h + b_ref[pl.ds(0, 1), :]
    h = jnp.maximum(h, NEG_SLOPE * h)             # leaky_relu, 2 VALU ops

    latent = None
    for layer in range(1, N_LAYERS):              # fully unrolled, layers 1..7
        w = w_ref[layer - 1]                      # (128, 128)
        b = b_ref[pl.ds(layer, 1), :]             # (1, 128), f32
        h = jnp.dot(h.astype(cdt), w, preferred_element_type=jnp.float32) + b
        if layer < N_LAYERS - 1:                  # last layer has no activation
            h = jnp.maximum(h, NEG_SLOPE * h)     # leaky_relu(0)=0 keeps pads zero
        if layer == LATENT_LAYER:                 # the 6-dim bottleneck (x4)
            latent = h

    # Lane-dense fused output slab.  Correctness of the overlay relies on the
    # pad lanes of both h (84:128) and latent (6:128) being exactly zero, which
    # holds because weights/biases are zero-padded and leaky_relu(0) == 0.
    out_ref[...] = h
    out_ref[:, RECON_DIM:RECON_DIM + LATENT_DIM] = latent[:, :LATENT_DIM]


@functools.partial(jax.jit,
                   static_argnames=("block_b", "use_bf16", "return_slab"))
def ae_forward(x, params, block_b=2048, use_bf16=True, return_slab=False):
    """x: (B, 84) float. params: flat list [w1, b1, ..., w8, b8], w as (in, out).

    Returns (x4, x8) with shapes (B, 6) and (B, 84), matching PyTorch forward().
    With return_slab=True, returns the raw (B, 128) slab (recon in lanes 0:84,
    latent in lanes 84:90) so downstream consumers can skip the re-slice pass.
    """
    B, F = x.shape
    assert F == IN_DIM

    n_steps, bb, B_pad = _grid_params(B, block_b)

    x = x.astype(jnp.float32)
    if B_pad != B:
        x = jnp.pad(x, ((0, B_pad - B), (0, 0)))

    wdt = jnp.bfloat16 if use_bf16 else jnp.float32

    # Pack weights/biases into small zero-padded resident tensors (constant
    # index_map -> DMA'd once, live across all grid steps).
    w0 = jnp.zeros((IN_DIM, LANE), wdt).at[:, :DIMS[1]].set(
        params[0].astype(wdt))
    w_rest = jnp.zeros((N_LAYERS - 1, LANE, LANE), wdt)
    b_packed = jnp.zeros((N_LAYERS, LANE), jnp.float32)
    b_packed = b_packed.at[0, :DIMS[1]].set(
        params[1].reshape(-1).astype(jnp.float32))
    for layer in range(1, N_LAYERS):
        din, dout = DIMS[layer], DIMS[layer + 1]
        w_rest = w_rest.at[layer - 1, :din, :dout].set(
            params[2 * layer].astype(wdt))
        b_packed = b_packed.at[layer, :dout].set(
            params[2 * layer + 1].reshape(-1).astype(jnp.float32))

    w_itemsize = 2 if use_bf16 else 4
    flops = 2 * sum(DIMS[l] * DIMS[l + 1] for l in range(N_LAYERS)) * B_pad
    bytes_accessed = (B_pad * (IN_DIM + LANE) * 4
                      + (w0.size + w_rest.size) * w_itemsize
                      + b_packed.size * 4)

    out_slab = pl.pallas_call(
        ae_kernel,
        grid=(n_steps,),
        in_specs=[
            pl.BlockSpec((bb, IN_DIM), lambda i: (i, 0)),                   # x tile
            pl.BlockSpec((IN_DIM, LANE), lambda i: (0, 0)),                 # layer-0 W
            pl.BlockSpec((N_LAYERS - 1, LANE, LANE), lambda i: (0, 0, 0)),  # layers 1..7 W
            pl.BlockSpec((N_LAYERS, LANE), lambda i: (0, 0)),               # biases
        ],
        out_specs=pl.BlockSpec((bb, LANE), lambda i: (i, 0)),
        out_shape=jax.ShapeDtypeStruct((B_pad, LANE), jnp.float32),
        compiler_params=pltpu.CompilerParams(
            dimension_semantics=("parallel",),
        ),
        cost_estimate=pl.CostEstimate(
            flops=flops, transcendentals=0, bytes_accessed=bytes_accessed),
    )(x, w0, w_rest, b_packed)

    if return_slab:
        return out_slab[:B]
    latent = out_slab[:B, RECON_DIM:RECON_DIM + LATENT_DIM]   # (B, 6)
    recon = out_slab[:B, :RECON_DIM]                          # (B, 84)
    return latent, recon


def init_params(key):
    """Deterministic init mimicking PyTorch Linear default (U[-1/sqrt(fan_in), +])."""
    params = []
    for layer in range(N_LAYERS):
        din, dout = DIMS[layer], DIMS[layer + 1]
        key, kw, kb = jax.random.split(key, 3)
        bound = 1.0 / (din ** 0.5)
        # Stored as (in, out) so the kernel does x @ w directly.
        w = jax.random.uniform(kw, (din, dout), jnp.float32, -bound, bound)
        b = jax.random.uniform(kb, (1, dout), jnp.float32, -bound, bound)
        params += [w, b]
    return params


def ae_reference(x, params, compute_dtype=jnp.float32):
    """Pure-JAX reference (optionally with the same bf16 operand casting)."""
    h = x.astype(jnp.float32)
    latent = None
    for layer in range(N_LAYERS):
        w = params[2 * layer].astype(compute_dtype)
        b = params[2 * layer + 1].reshape(1, -1).astype(jnp.float32)
        h = jnp.dot(h.astype(compute_dtype), w,
                    preferred_element_type=jnp.float32) + b
        if layer < N_LAYERS - 1:
            h = jnp.maximum(h, NEG_SLOPE * h)
        if layer == LATENT_LAYER:
            latent = h
    return latent, h


if __name__ == "__main__":
    key = jax.random.PRNGKey(0)
    kx, kp = jax.random.split(key)
    params = init_params(kp)

    # 1) f32 exact path, small batch (single grid step).
    B = 16
    x = jax.random.normal(kx, (B, 84), jnp.float32)
    lat, rec = ae_forward(x, params, use_bf16=False)
    jax.block_until_ready((lat, rec))
    lat_ref, rec_ref = ae_reference(x, params)
    assert lat.shape == (B, 6) and rec.shape == (B, 84)
    assert jnp.allclose(lat, lat_ref, atol=1e-4, rtol=1e-4)
    assert jnp.allclose(rec, rec_ref, atol=1e-4, rtol=1e-4)

    # 2) bf16 fast path, ragged batch (pad-and-slice remainder path).
    B2 = 10
    x2 = jax.random.normal(jax.random.PRNGKey(1), (B2, 84), jnp.float32)
    lat2, rec2 = ae_forward(x2, params, use_bf16=True)
    jax.block_until_ready((lat2, rec2))
    lat_bf, rec_bf = ae_reference(x2, params, compute_dtype=jnp.bfloat16)
    assert lat2.shape == (B2, 6) and rec2.shape == (B2, 84)
    assert jnp.allclose(lat2, lat_bf, atol=5e-3, rtol=5e-3)
    assert jnp.allclose(rec2, rec_bf, atol=5e-3, rtol=5e-3)
    lat_f32, rec_f32 = ae_reference(x2, params)          # loose sanity vs f32
    assert jnp.allclose(rec2, rec_f32, atol=5e-2, rtol=5e-2)

    # 3) bf16 path with B > 128 -> 2 grid steps (exercises the batch index_map
    #    and the v7x dual-TensorCore split).
    B3 = 200
    x3 = jax.random.normal(jax.random.PRNGKey(2), (B3, 84), jnp.float32)
    lat3, rec3 = ae_forward(x3, params, use_bf16=True)
    jax.block_until_ready((lat3, rec3))
    lat3_ref, rec3_ref = ae_reference(x3, params, compute_dtype=jnp.bfloat16)
    assert lat3.shape == (B3, 6) and rec3.shape == (B3, 84)
    assert jnp.allclose(lat3, lat3_ref, atol=5e-3, rtol=5e-3)
    assert jnp.allclose(rec3, rec3_ref, atol=5e-3, rtol=5e-3)

    print("KERNEL_OK")
</pallas_src>

<mosaic_0001>
module attributes {stable_mosaic.version = 11 : i64} {
  func.func @ae_kernel(%arg0: i32, %arg1: memref<16x84xf32, #tpu.memory_space<vmem>>, %arg2: memref<84x128xf32, #tpu.memory_space<vmem>>, %arg3: memref<7x128x128xf32, #tpu.memory_space<vmem>>, %arg4: memref<8x128xf32, #tpu.memory_space<vmem>>, %arg5: memref<16x128xf32, #tpu.memory_space<vmem>>) attributes {dimension_semantics = [#tpu.dimension_semantics<parallel>], iteration_bounds = array<i64: 1>, scalar_prefetch = 0 : i64, scratch_operands = 0 : i64, tpu.core_type = #tpu.core_type<tc>, window_params = [{transform_indices = @transform_0, window_bounds = array<i64: 16, 84>}, {pipeline_mode = #tpu.pipeline_mode<synchronous>, transform_indices = @transform_1, window_bounds = array<i64: 84, 128>}, {pipeline_mode = #tpu.pipeline_mode<synchronous>, transform_indices = @transform_2, window_bounds = array<i64: 7, 128, 128>}, {pipeline_mode = #tpu.pipeline_mode<synchronous>, transform_indices = @transform_3, window_bounds = array<i64: 8, 128>}, {transform_indices = @transform_4, window_bounds = array<i64: 16, 128>}]} {
    %c0 = arith.constant 0 : index
    %c0_0 = arith.constant 0 : index
    %0 = vector.load %arg1[%c0, %c0_0] : memref<16x84xf32, #tpu.memory_space<vmem>>, vector<16x84xf32>
    %c0_1 = arith.constant 0 : index
    %c0_2 = arith.constant 0 : index
    %1 = vector.load %arg2[%c0_1, %c0_2] : memref<84x128xf32, #tpu.memory_space<vmem>>, vector<84x128xf32>
    %cst = arith.constant dense<0.000000e+00> : vector<16x128xf32>
    %2 = tpu.matmul %0, %1, %cst {dimension_numbers = #tpu.dot_dimension_numbers<[1], [0], [0], [1], [0, 0, 1, 1], [], []>} : vector<16x84xf32>, vector<84x128xf32>, vector<16x128xf32> -> vector<16x128xf32>
    %c0_3 = arith.constant 0 : index
    %c0_4 = arith.constant 0 : index
    %3 = vector.load %arg4[%c0_3, %c0_4] : memref<8x128xf32, #tpu.memory_space<vmem>>, vector<1x128xf32>
    %4 = vector.broadcast %3 : vector<1x128xf32> to vector<16x128xf32>
    %5 = arith.addf %2, %4 : vector<16x128xf32>
    %cst_5 = arith.constant 0.00999999977 : f32
    %6 = vector.broadcast %cst_5 : f32 to vector<16x128xf32>
    %7 = arith.mulf %6, %5 : vector<16x128xf32>
    %8 = arith.maximumf %5, %7 : vector<16x128xf32>
    %c0_6 = arith.constant 0 : index
    %c0_7 = arith.constant 0 : index
    %c0_8 = arith.constant 0 : index
    %9 = vector.load %arg3[%c0_6, %c0_7, %c0_8] : memref<7x128x128xf32, #tpu.memory_space<vmem>>, vector<1x128x128xf32>
    %10 = vector.shape_cast %9 : vector<1x128x128xf32> to vector<128x128xf32>
    %c1 = arith.constant 1 : index
    %c0_9 = arith.constant 0 : index
    %11 = vector.load %arg4[%c1, %c0_9] : memref<8x128xf32, #tpu.memory_space<vmem>>, vector<1x128xf32>
    %cst_10 = arith.constant dense<0.000000e+00> : vector<16x128xf32>
    %12 = tpu.matmul %8, %10, %cst_10 {dimension_numbers = #tpu.dot_dimension_numbers<[1], [0], [0], [1], [0, 0, 1, 1], [], []>} : vector<16x128xf32>, vector<128x128xf32>, vector<16x128xf32> -> vector<16x128xf32>
    %13 = vector.broadcast %11 : vector<1x128xf32> to vector<16x128xf32>
    %14 = arith.addf %12, %13 : vector<16x128xf32>
    %cst_11 = arith.constant 0.00999999977 : f32
    %15 = vector.broadcast %cst_11 : f32 to vector<16x128xf32>
    %16 = arith.mulf %15, %14 : vector<16x128xf32>
    %17 = arith.maximumf %14, %16 : vector<16x128xf32>
    %c1_12 = arith.constant 1 : index
    %c0_13 = arith.constant 0 : index
    %c0_14 = arith.constant 0 : index
    %18 = vector.load %arg3[%c1_12, %c0_13, %c0_14] : memref<7x128x128xf32, #tpu.memory_space<vmem>>, vector<1x128x128xf32>
    %19 = vector.shape_cast %18 : vector<1x128x128xf32> to vector<128x128xf32>
    %c2 = arith.constant 2 : index
    %c0_15 = arith.constant 0 : index
    %20 = vector.load %arg4[%c2, %c0_15] : memref<8x128xf32, #tpu.memory_space<vmem>>, vector<1x128xf32>
    %cst_16 = arith.constant dense<0.000000e+00> : vector<16x128xf32>
    %21 = tpu.matmul %17, %19, %cst_16 {dimension_numbers = #tpu.dot_dimension_numbers<[1], [0], [0], [1], [0, 0, 1, 1], [], []>} : vector<16x128xf32>, vector<128x128xf32>, vector<16x128xf32> -> vector<16x128xf32>
    %22 = vector.broadcast %20 : vector<1x128xf32> to vector<16x128xf32>
    %23 = arith.addf %21, %22 : vector<16x128xf32>
    %cst_17 = arith.constant 0.00999999977 : f32
    %24 = vector.broadcast %cst_17 : f32 to vector<16x128xf32>
    %25 = arith.mulf %24, %23 : vector<16x128xf32>
    %26 = arith.maximumf %23, %25 : vector<16x128xf32>
    %c2_18 = arith.constant 2 : index
    %c0_19 = arith.constant 0 : index
    %c0_20 = arith.constant 0 : index
    %27 = vector.load %arg3[%c2_18, %c0_19, %c0_20] : memref<7x128x128xf32, #tpu.memory_space<vmem>>, vector<1x128x128xf32>
    %28 = vector.shape_cast %27 : vector<1x128x128xf32> to vector<128x128xf32>
    %c3 = arith.constant 3 : index
    %c0_21 = arith.constant 0 : index
    %29 = vector.load %arg4[%c3, %c0_21] : memref<8x128xf32, #tpu.memory_space<vmem>>, vector<1x128xf32>
    %cst_22 = arith.constant dense<0.000000e+00> : vector<16x128xf32>
    %30 = tpu.matmul %26, %28, %cst_22 {dimension_numbers = #tpu.dot_dimension_numbers<[1], [0], [0], [1], [0, 0, 1, 1], [], []>} : vector<16x128xf32>, vector<128x128xf32>, vector<16x128xf32> -> vector<16x128xf32>
    %31 = vector.broadcast %29 : vector<1x128xf32> to vector<16x128xf32>
    %32 = arith.addf %30, %31 : vector<16x128xf32>
    %cst_23 = arith.constant 0.00999999977 : f32
    %33 = vector.broadcast %cst_23 : f32 to vector<16x128xf32>
    %34 = arith.mulf %33, %32 : vector<16x128xf32>
    %35 = arith.maximumf %32, %34 : vector<16x128xf32>
    %c3_24 = arith.constant 3 : index
    %c0_25 = arith.constant 0 : index
    %c0_26 = arith.constant 0 : index
    %36 = vector.load %arg3[%c3_24, %c0_25, %c0_26] : memref<7x128x128xf32, #tpu.memory_space<vmem>>, vector<1x128x128xf32>
    %37 = vector.shape_cast %36 : vector<1x128x128xf32> to vector<128x128xf32>
    %c4 = arith.constant 4 : index
    %c0_27 = arith.constant 0 : index
    %38 = vector.load %arg4[%c4, %c0_27] : memref<8x128xf32, #tpu.memory_space<vmem>>, vector<1x128xf32>
    %cst_28 = arith.constant dense<0.000000e+00> : vector<16x128xf32>
    %39 = tpu.matmul %35, %37, %cst_28 {dimension_numbers = #tpu.dot_dimension_numbers<[1], [0], [0], [1], [0, 0, 1, 1], [], []>} : vector<16x128xf32>, vector<128x128xf32>, vector<16x128xf32> -> vector<16x128xf32>
    %40 = vector.broadcast %38 : vector<1x128xf32> to vector<16x128xf32>
    %41 = arith.addf %39, %40 : vector<16x128xf32>
    %cst_29 = arith.constant 0.00999999977 : f32
    %42 = vector.broadcast %cst_29 : f32 to vector<16x128xf32>
    %43 = arith.mulf %42, %41 : vector<16x128xf32>
    %44 = arith.maximumf %41, %43 : vector<16x128xf32>
    %c4_30 = arith.constant 4 : index
    %c0_31 = arith.constant 0 : index
    %c0_32 = arith.constant 0 : index
    %45 = vector.load %arg3[%c4_30, %c0_31, %c0_32] : memref<7x128x128xf32, #tpu.memory_space<vmem>>, vector<1x128x128xf32>
    %46 = vector.shape_cast %45 : vector<1x128x128xf32> to vector<128x128xf32>
    %c5 = arith.constant 5 : index
    %c0_33 = arith.constant 0 : index
    %47 = vector.load %arg4[%c5, %c0_33] : memref<8x128xf32, #tpu.memory_space<vmem>>, vector<1x128xf32>
    %cst_34 = arith.constant dense<0.000000e+00> : vector<16x128xf32>
    %48 = tpu.matmul %44, %46, %cst_34 {dimension_numbers = #tpu.dot_dimension_numbers<[1], [0], [0], [1], [0, 0, 1, 1], [], []>} : vector<16x128xf32>, vector<128x128xf32>, vector<16x128xf32> -> vector<16x128xf32>
    %49 = vector.broadcast %47 : vector<1x128xf32> to vector<16x128xf32>
    %50 = arith.addf %48, %49 : vector<16x128xf32>
    %cst_35 = arith.constant 0.00999999977 : f32
    %51 = vector.broadcast %cst_35 : f32 to vector<16x128xf32>
    %52 = arith.mulf %51, %50 : vector<16x128xf32>
    %53 = arith.maximumf %50, %52 : vector<16x128xf32>
    %c5_36 = arith.constant 5 : index
    %c0_37 = arith.constant 0 : index
    %c0_38 = arith.constant 0 : index
    %54 = vector.load %arg3[%c5_36, %c0_37, %c0_38] : memref<7x128x128xf32, #tpu.memory_space<vmem>>, vector<1x128x128xf32>
    %55 = vector.shape_cast %54 : vector<1x128x128xf32> to vector<128x128xf32>
    %c6 = arith.constant 6 : index
    %c0_39 = arith.constant 0 : index
    %56 = vector.load %arg4[%c6, %c0_39] : memref<8x128xf32, #tpu.memory_space<vmem>>, vector<1x128xf32>
    %cst_40 = arith.constant dense<0.000000e+00> : vector<16x128xf32>
    %57 = tpu.matmul %53, %55, %cst_40 {dimension_numbers = #tpu.dot_dimension_numbers<[1], [0], [0], [1], [0, 0, 1, 1], [], []>} : vector<16x128xf32>, vector<128x128xf32>, vector<16x128xf32> -> vector<16x128xf32>
    %58 = vector.broadcast %56 : vector<1x128xf32> to vector<16x128xf32>
    %59 = arith.addf %57, %58 : vector<16x128xf32>
    %cst_41 = arith.constant 0.00999999977 : f32
    %60 = vector.broadcast %cst_41 : f32 to vector<16x128xf32>
    %61 = arith.mulf %60, %59 : vector<16x128xf32>
    %62 = arith.maximumf %59, %61 : vector<16x128xf32>
    %c6_42 = arith.constant 6 : index
    %c0_43 = arith.constant 0 : index
    %c0_44 = arith.constant 0 : index
    %63 = vector.load %arg3[%c6_42, %c0_43, %c0_44] : memref<7x128x128xf32, #tpu.memory_space<vmem>>, vector<1x128x128xf32>
    %64 = vector.shape_cast %63 : vector<1x128x128xf32> to vector<128x128xf32>
    %c7 = arith.constant 7 : index
    %c0_45 = arith.constant 0 : index
    %65 = vector.load %arg4[%c7, %c0_45] : memref<8x128xf32, #tpu.memory_space<vmem>>, vector<1x128xf32>
    %cst_46 = arith.constant dense<0.000000e+00> : vector<16x128xf32>
    %66 = tpu.matmul %62, %64, %cst_46 {dimension_numbers = #tpu.dot_dimension_numbers<[1], [0], [0], [1], [0, 0, 1, 1], [], []>} : vector<16x128xf32>, vector<128x128xf32>, vector<16x128xf32> -> vector<16x128xf32>
    %67 = vector.broadcast %65 : vector<1x128xf32> to vector<16x128xf32>
    %68 = arith.addf %66, %67 : vector<16x128xf32>
    %c0_47 = arith.constant 0 : index
    %c0_48 = arith.constant 0 : index
    %69 = vector.load %arg5[%c0_47, %c0_48] : memref<16x128xf32, #tpu.memory_space<vmem>>, vector<16x128xf32>
    tpu.vector_store %arg5[%c0_47, %c0_48], %68 {strides = array<i32>} : memref<16x128xf32, #tpu.memory_space<vmem>>, vector<16x128xf32>,
    %70 = vector.extract_strided_slice %35 {offsets = [0, 0], sizes = [16, 6], strides = [1, 1]} : vector<16x128xf32> to vector<16x6xf32>
    %c0_49 = arith.constant 0 : index
    %c84 = arith.constant 84 : index
    %71 = vector.load %arg5[%c0_49, %c84] : memref<16x128xf32, #tpu.memory_space<vmem>>, vector<16x6xf32>
    tpu.vector_store %arg5[%c0_49, %c84], %70 {strides = array<i32>} : memref<16x128xf32, #tpu.memory_space<vmem>>, vector<16x6xf32>,
    return
  }
  func.func @transform_0(%arg0: i32) -> (i32, i32) {
    %c0_i32 = arith.constant 0 : i32
    %c0_i32_0 = arith.constant 0 : i32
    return %arg0, %c0_i32 : i32, i32
  }
  func.func @transform_1(%arg0: i32) -> (i32, i32) {
    %c0_i32 = arith.constant 0 : i32
    %c0_i32_0 = arith.constant 0 : i32
    %c0_i32_1 = arith.constant 0 : i32
    return %c0_i32, %c0_i32_0 : i32, i32
  }
  func.func @transform_2(%arg0: i32) -> (i32, i32, i32) {
    %c0_i32 = arith.constant 0 : i32
    %c0_i32_0 = arith.constant 0 : i32
    %c0_i32_1 = arith.constant 0 : i32
    %c0_i32_2 = arith.constant 0 : i32
    return %c0_i32, %c0_i32_0, %c0_i32_1 : i32, i32, i32
  }
  func.func @transform_3(%arg0: i32) -> (i32, i32) {
    %c0_i32 = arith.constant 0 : i32
    %c0_i32_0 = arith.constant 0 : i32
    %c0_i32_1 = arith.constant 0 : i32
    return %c0_i32, %c0_i32_0 : i32, i32
  }
  func.func @transform_4(%arg0: i32) -> (i32, i32) {
    %c0_i32 = arith.constant 0 : i32
    %c0_i32_0 = arith.constant 0 : i32
    return %arg0, %c0_i32 : i32, i32
  }
}

</mosaic_0001>

<llo_original>
// kernel: ae_forward.1
$region0: #{ae_forward.1}
  #allocation0 [shape = 'u32[]', space=smem, size = 0x4, offset = 0x4, fixed_abs, tag = 'smem constant byte address 0x4 - core index']
  #allocation1 [shape = 'u32[144,128]{1,0:T(1,128)}', space=vmem, size = 0x12000, scoped, tag = 'internal scratch']
  %s0 = inlined_call_operand.vmem [shape: f32[16,84], index: 0, kind: input, shape index: {}]
  %s1 = inlined_call_operand.vmem [shape: f32[84,128], index: 1, kind: input, shape index: {}]
  %s2 = inlined_call_operand.vmem [shape: f32[7,128,128], index: 2, kind: input, shape index: {}]
  %s3 = inlined_call_operand.vmem [shape: f32[8,128], index: 3, kind: input, shape index: {}]
  %s4 = inlined_call_operand.vmem [shape: f32[16,128], index: 4, kind: output, shape index: {}]
  %s5 = sld [smem:[#allocation0]]
  $region26: #{ae_forward.1} parent=0
    _
  %s7 = ssub.s32 1, %s5
  %s8 = scalar_select 0, %s7, %s5
  // Predicated region
  $region2: #{ae_forward.1} parent=0 // pred_check
    _
  $region3: #{ae_forward.1} parent=0 // pred_check_branch
    %10 = sbr.rel (0) target = $region5
  $region4: #{ae_forward.1} parent=0 // pred_region
    _
  $region5: #{ae_forward.1} parent=0 // pred_fallthru
    _
  // Predicated region
  $region6: #{ae_forward.1} parent=0 // pred_check
    _
  $region7: #{ae_forward.1} parent=0 // pred_check_branch
    %12 = sbr.rel (0) target = $region9
  $region8: #{ae_forward.1} parent=0 // pred_region
    _
  $region9: #{ae_forward.1} parent=0 // pred_fallthru
    _
  // Predicated region
  $region10: #{ae_forward.1} parent=0 // pred_check
    _
  $region11: #{ae_forward.1} parent=0 // pred_check_branch
    %14 = sbr.rel (0) target = $region13
  $region12: #{ae_forward.1} parent=0 // pred_region
    _
  $region13: #{ae_forward.1} parent=0 // pred_fallthru
    _
  // Predicated region
  $region14: #{ae_forward.1} parent=0 // pred_check
    _
  $region15: #{ae_forward.1} parent=0 // pred_check_branch
    %16 = sbr.rel (0) target = $region17
  $region16: #{ae_forward.1} parent=0 // pred_region
    _
  $region17: #{ae_forward.1} parent=0 // pred_fallthru
    _
  %v17 = vld [vmem:[%s0] sm:$0xff]
  %v18 = vld [vmem:[%s0 + $0x8] sm:$0xff]
  %v19 = vld [vmem:[%s1] sm:$0xff]
  %v20 = vld [vmem:[%s1 + $0x8] sm:$0xff]
  %v21 = vld [vmem:[%s1 + $0x10] sm:$0xff]
  %v22 = vld [vmem:[%s1 + $0x18] sm:$0xff]
  %v23 = vld [vmem:[%s1 + $0x20] sm:$0xff]
  %v24 = vld [vmem:[%s1 + $0x28] sm:$0xff]
  %v25 = vld [vmem:[%s1 + $0x30] sm:$0xff]
  %v26 = vld [vmem:[%s1 + $0x38] sm:$0xff]
  %v27 = vld [vmem:[%s1 + $0x40] sm:$0xff]
  %v28 = vld [vmem:[%s1 + $0x48] sm:$0xff]
  %v29 = vld [vmem:[%s1 + $0x50] sm:$0xf]
  %v30 = vld [vmem:[%s3] sm:$0x1]
  %v31 = vlaneseq
  %v32 = vshrl.u32 %v31, 7
  %v33 = vsub.s32 0, %v32
  %v34 = vrot.slane %v30, %v33
  %vm35 = vcmask 687104
  %v37 = vsel %vm35, %v17, 0
  %v40 = vsel %vm35, %v18, 0
  %vm42 = vcmask 1043456
  %v44 = vsel %vm42, %v29, 0
  %46 = vmatprep.subr.mxu0 0.0
  %47 = vmatpush1.msra.mxu0 %v19
  %48 = vmatprep.subr.mxu0 0.0
  %49 = vmatpush1.msra.mxu0 %v20
  %50 = vmatprep.subr.mxu0 0.0
  %51 = vmatpush1.msra.mxu0 %v21
  %52 = vmatprep.subr.mxu0 0.0
  %53 = vmatpush1.msra.mxu0 %v22
  %54 = vmatprep.subr.mxu0 0.0
  %55 = vmatpush1.msra.mxu0 %v23
  %56 = vmatprep.subr.mxu0 0.0
  %57 = vmatpush1.msra.mxu0 %v24
  %58 = vmatprep.subr.mxu0 0.0
  %59 = vmatpush1.msra.mxu0 %v25
  %60 = vmatprep.subr.mxu0 0.0
  %61 = vmatpush1.msra.mxu0 %v26
  %62 = vmatprep.subr.mxu0 0.0
  %63 = vmatpush1.msra.mxu0 %v27
  %64 = vmatprep.subr.mxu0 0.0
  %65 = vmatpush1.msra.mxu0 %v28
  %66 = vmatprep.subr.mxu0 0.0
  %67 = vmatpush1.msra.mxu0 %v44
  %68 = vmatprep.subr.mxu0 0.0
  %69 = vmatpush1.msra.mxu0 0.0
  %70 = vmatprep.subr.mxu0 0.0
  %71 = vmatpush1.msra.mxu0 0.0
  %72 = vmatprep.subr.mxu0 0.0
  %73 = vmatpush1.msra.mxu0 0.0
  %74 = vmatprep.subr.mxu0 0.0
  %75 = vmatpush1.msra.mxu0 0.0
  %76 = vmatprep.subr.mxu0 0.0
  %77 = vmatpush1.msra.mxu0 0.0
  %78 = vmatprep.subr.mxu0 0.0
  %79 = vmatpush1.msra.mxu0 0.0
  %80 = vmatprep.subr.mxu0 0.0
  %81 = vmatpush1.msra.mxu0 0.0
  %82 = vmatprep.subr.mxu0 0.0
  %83 = vmatpush1.msra.mxu0 0.0
  %84 = vmatprep.subr.mxu0 0.0
  %85 = vmatpush1.msra.mxu0 0.0
  %86 = vmatprep.subr.mxu0 0.0
  %87 = vmatpush1.msra.mxu0 0.0
  %88 = vmatprep.subr.mxu0 0.0
  %89 = vmatpush1.msra.mxu0 0.0
  %90 = vmatprep.subr.mxu0 0.0
  %91 = vmatpush1.msra.mxu0 0.0
  %92 = vmatprep.subr.mxu0 0.0
  %93 = vmatpush1.msra.mxu0 0.0
  %94 = vmatprep.subr.mxu0 0.0
  %95 = vmatpush1.msra.mxu0 0.0
  %96 = vmatprep.subr.mxu0 0.0
  %97 = vmatpush1.msra.mxu0 0.0
  %98 = vmatprep.subr.mxu0 0.0
  %99 = vmatpush1.msra.mxu0 0.0
  %100 = vmatprep.subr.mxu0 0.0
  %101 = vmatpush1.msra.mxu0 0.0
  %102 = vmatprep.subr.mxu0 0.0
  %103 = vmatpush1.msra.mxu0 0.0
  %104 = vmatprep.subr.mxu0 0.0
  %105 = vmatpush1.msra.mxu0 0.0
  %106 = vmatprep.subr.mxu0 0.0
  %107 = vmatpush1.msra.mxu0 0.0
  %108 = vmatprep.subr.mxu0 0.0
  %109 = vmatpush1.msra.mxu0 0.0
  %110 = vmatprep.mubr.f32.mxu0 0.0
  %111 = vmatmul.mubr.f32.gmra.mrb[0].mxu0 %v37
  %v112 = vpop.f32.mrb[0].mxu0
  %v113 = vadd.f32 %v34, %v112
  %v114 = vpop.f32.mrb[0].mxu0
  %115 = vmatprep.mubr.f32.mxu0 0.0
  %116 = vmatmul.mubr.f32.gmra.mrb[0].mxu0 %v40
  %v117 = vpop.f32.mrb[0].mxu0
  %v118 = vadd.f32 %v34, %v117
  %v119 = vpop.f32.mrb[0].mxu0
  %120 = vdwg.mxu0
  %v121 = vmul.f32 %v113, 0.01
  %v122 = vmul.f32 %v118, 0.01
  %v123 = vmax.f32 %v113, %v121
  %v124 = vmax.f32 %v118, %v122
  %v125 = vld [vmem:[%s2] sm:$0xff]
  %v126 = vld [vmem:[%s2 + $0x8] sm:$0xff]
  %v127 = vld [vmem:[%s2 + $0x10] sm:$0xff]
  %v128 = vld [vmem:[%s2 + $0x18] sm:$0xff]
  %v129 = vld [vmem:[%s2 + $0x20] sm:$0xff]
  %v130 = vld [vmem:[%s2 + $0x28] sm:$0xff]
  %v131 = vld [vmem:[%s2 + $0x30] sm:$0xff]
  %v132 = vld [vmem:[%s2 + $0x38] sm:$0xff]
  %v133 = vld [vmem:[%s2 + $0x40] sm:$0xff]
  %v134 = vld [vmem:[%s2 + $0x48] sm:$0xff]
  %v135 = vld [vmem:[%s2 + $0x50] sm:$0xff]
  %v136 = vld [vmem:[%s2 + $0x58] sm:$0xff]
  %v137 = vld [vmem:[%s2 + $0x60] sm:$0xff]
  %v138 = vld [vmem:[%s2 + $0x68] sm:$0xff]
  %v139 = vld [vmem:[%s2 + $0x70] sm:$0xff]
  %v140 = vld [vmem:[%s2 + $0x78] sm:$0xff]
  %v141 = vld [vmem:[%s3 + $0x1] sm:$0x1]
  %v142 = vlaneseq
  %v143 = vshrl.u32 %v142, 7
  %v144 = vsub.s32 0, %v143
  %v145 = vrot.slane %v141, %v144
  %146 = vmatprep.subr.mxu0 0.0
  %147 = vmatpush1.msra.mxu0 %v125
  %148 = vmatprep.subr.mxu0 0.0
  %149 = vmatpush1.msra.mxu0 %v126
  %150 = vmatprep.subr.mxu0 0.0
  %151 = vmatpush1.msra.mxu0 %v127
  %152 = vmatprep.subr.mxu0 0.0
  %153 = vmatpush1.msra.mxu0 %v128
  %154 = vmatprep.subr.mxu0 0.0
  %155 = vmatpush1.msra.mxu0 %v129
  %156 = vmatprep.subr.mxu0 0.0
  %157 = vmatpush1.msra.mxu0 %v130
  %158 = vmatprep.subr.mxu0 0.0
  %159 = vmatpush1.msra.mxu0 %v131
  %160 = vmatprep.subr.mxu0 0.0
  %161 = vmatpush1.msra.mxu0 %v132
  %162 = vmatprep.subr.mxu0 0.0
  %163 = vmatpush1.msra.mxu0 %v133
  %164 = vmatprep.subr.mxu0 0.0
  %165 = vmatpush1.msra.mxu0 %v134
  %166 = vmatprep.subr.mxu0 0.0
  %167 = vmatpush1.msra.mxu0 %v135
  %168 = vmatprep.subr.mxu0 0.0
  %169 = vmatpush1.msra.mxu0 %v136
  %170 = vmatprep.subr.mxu0 0.0
  %171 = vmatpush1.msra.mxu0 %v137
  %172 = vmatprep.subr.mxu0 0.0
  %173 = vmatpush1.msra.mxu0 %v138
  %174 = vmatprep.subr.mxu0 0.0
  %175 = vmatpush1.msra.mxu0 %v139
  %176 = vmatprep.subr.mxu0 0.0
  %177 = vmatpush1.msra.mxu0 %v140
  %178 = vmatprep.subr.mxu0 0.0
  %179 = vmatpush1.msra.mxu0 0.0
  %180 = vmatprep.subr.mxu0 0.0
  %181 = vmatpush1.msra.mxu0 0.0
  %182 = vmatprep.subr.mxu0 0.0
  %183 = vmatpush1.msra.mxu0 0.0
  %184 = vmatprep.subr.mxu0 0.0
  %185 = vmatpush1.msra.mxu0 0.0
  %186 = vmatprep.subr.mxu0 0.0
  %187 = vmatpush1.msra.mxu0 0.0
  %188 = vmatprep.subr.mxu0 0.0
  %189 = vmatpush1.msra.mxu0 0.0
  %190 = vmatprep.subr.mxu0 0.0
  %191 = vmatpush1.msra.mxu0 0.0
  %192 = vmatprep.subr.mxu0 0.0
  %193 = vmatpush1.msra.mxu0 0.0
  %194 = vmatprep.subr.mxu0 0.0
  %195 = vmatpush1.msra.mxu0 0.0
  %196 = vmatprep.subr.mxu0 0.0
  %197 = vmatpush1.msra.mxu0 0.0
  %198 = vmatprep.subr.mxu0 0.0
  %199 = vmatpush1.msra.mxu0 0.0
  %200 = vmatprep.subr.mxu0 0.0
  %201 = vmatpush1.msra.mxu0 0.0
  %202 = vmatprep.subr.mxu0 0.0
  %203 = vmatpush1.msra.mxu0 0.0
  %204 = vmatprep.subr.mxu0 0.0
  %205 = vmatpush1.msra.mxu0 0.0
  %206 = vmatprep.subr.mxu0 0.0
  %207 = vmatpush1.msra.mxu0 0.0
  %208 = vmatprep.subr.mxu0 0.0
  %209 = vmatpush1.msra.mxu0 0.0
  %210 = vmatprep.mubr.f32.mxu0 0.0
  %211 = vmatmul.mubr.f32.gmra.mrb[0].mxu0 %v123
  %v212 = vpop.f32.mrb[0].mxu0
  %v213 = vadd.f32 %v145, %v212
  %v214 = vpop.f32.mrb[0].mxu0
  %215 = vmatprep.mubr.f32.mxu0 0.0
  %216 = vmatmul.mubr.f32.gmra.mrb[0].mxu0 %v124
  %v217 = vpop.f32.mrb[0].mxu0
  %v218 = vadd.f32 %v145, %v217
  %v219 = vpop.f32.mrb[0].mxu0
  %220 = vdwg.mxu0
  %v221 = vmul.f32 %v213, 0.01
  %v222 = vmul.f32 %v218, 0.01
  %v223 = vmax.f32 %v213, %v221
  %v224 = vmax.f32 %v218, %v222
  %s225 = scalar_lea.vmem %s2, 128
  %v226 = vld [vmem:[%s225] sm:$0xff]
  %v227 = vld [vmem:[%s225 + $0x8] sm:$0xff]
  %v228 = vld [vmem:[%s225 + $0x10] sm:$0xff]
  %v229 = vld [vmem:[%s225 + $0x18] sm:$0xff]
  %v230 = vld [vmem:[%s225 + $0x20] sm:$0xff]
  %v231 = vld [vmem:[%s225 + $0x28] sm:$0xff]
  %v232 = vld [vmem:[%s225 + $0x30] sm:$0xff]
  %v233 = vld [vmem:[%s225 + $0x38] sm:$0xff]
  %v234 = vld [vmem:[%s225 + $0x40] sm:$0xff]
  %v235 = vld [vmem:[%s225 + $0x48] sm:$0xff]
  %v236 = vld [vmem:[%s225 + $0x50] sm:$0xff]
  %v237 = vld [vmem:[%s225 + $0x58] sm:$0xff]
  %v238 = vld [vmem:[%s225 + $0x60] sm:$0xff]
  %v239 = vld [vmem:[%s225 + $0x68] sm:$0xff]
  %v240 = vld [vmem:[%s225 + $0x70] sm:$0xff]
  %v241 = vld [vmem:[%s225 + $0x78] sm:$0xff]
  %v242 = vld [vmem:[%s3 + $0x2] sm:$0x1]
  %v243 = vlaneseq
  %v244 = vshrl.u32 %v243, 7
  %v245 = vsub.s32 0, %v244
  %v246 = vrot.slane %v242, %v245
  %247 = vmatprep.subr.mxu0 0.0
  %248 = vmatpush1.msra.mxu0 %v226
  %249 = vmatprep.subr.mxu0 0.0
  %250 = vmatpush1.msra.mxu0 %v227
  %251 = vmatprep.subr.mxu0 0.0
  %252 = vmatpush1.msra.mxu0 %v228
  %253 = vmatprep.subr.mxu0 0.0
  %254 = vmatpush1.msra.mxu0 %v229
  %255 = vmatprep.subr.mxu0 0.0
  %256 = vmatpush1.msra.mxu0 %v230
  %257 = vmatprep.subr.mxu0 0.0
  %258 = vmatpush1.msra.mxu0 %v231
  %259 = vmatprep.subr.mxu0 0.0
  %260 = vmatpush1.msra.mxu0 %v232
  %261 = vmatprep.subr.mxu0 0.0
  %262 = vmatpush1.msra.mxu0 %v233
  %263 = vmatprep.subr.mxu0 0.0
  %264 = vmatpush1.msra.mxu0 %v234
  %265 = vmatprep.subr.mxu0 0.0
  %266 = vmatpush1.msra.mxu0 %v235
  %267 = vmatprep.subr.mxu0 0.0
  %268 = vmatpush1.msra.mxu0 %v236
  %269 = vmatprep.subr.mxu0 0.0
  %270 = vmatpush1.msra.mxu0 %v237
  %271 = vmatprep.subr.mxu0 0.0
  %272 = vmatpush1.msra.mxu0 %v238
  %273 = vmatprep.subr.mxu0 0.0
  %274 = vmatpush1.msra.mxu0 %v239
  %275 = vmatprep.subr.mxu0 0.0
  %276 = vmatpush1.msra.mxu0 %v240
  %277 = vmatprep.subr.mxu0 0.0
  %278 = vmatpush1.msra.mxu0 %v241
  %279 = vmatprep.subr.mxu0 0.0
  %280 = vmatpush1.msra.mxu0 0.0
  %281 = vmatprep.subr.mxu0 0.0
  %282 = vmatpush1.msra.mxu0 0.0
  %283 = vmatprep.subr.mxu0 0.0
  %284 = vmatpush1.msra.mxu0 0.0
  %285 = vmatprep.subr.mxu0 0.0
  %286 = vmatpush1.msra.mxu0 0.0
  %287 = vmatprep.subr.mxu0 0.0
  %288 = vmatpush1.msra.mxu0 0.0
  %289 = vmatprep.subr.mxu0 0.0
  %290 = vmatpush1.msra.mxu0 0.0
  %291 = vmatprep.subr.mxu0 0.0
  %292 = vmatpush1.msra.mxu0 0.0
  %293 = vmatprep.subr.mxu0 0.0
  %294 = vmatpush1.msra.mxu0 0.0
  %295 = vmatprep.subr.mxu0 0.0
  %296 = vmatpush1.msra.mxu0 0.0
  %297 = vmatprep.subr.mxu0 0.0
  %298 = vmatpush1.msra.mxu0 0.0
  %299 = vmatprep.subr.mxu0 0.0
  %300 = vmatpush1.msra.mxu0 0.0
  %301 = vmatprep.subr.mxu0 0.0
  %302 = vmatpush1.msra.mxu0 0.0
  %303 = vmatprep.subr.mxu0 0.0
  %304 = vmatpush1.msra.mxu0 0.0
  %305 = vmatprep.subr.mxu0 0.0
  %306 = vmatpush1.msra.mxu0 0.0
  %307 = vmatprep.subr.mxu0 0.0
  %308 = vmatpush1.msra.mxu0 0.0
  %309 = vmatprep.subr.mxu0 0.0
  %310 = vmatpush1.msra.mxu0 0.0
  %311 = vmatprep.mubr.f32.mxu0 0.0
  %312 = vmatmul.mubr.f32.gmra.mrb[0].mxu0 %v223
  %v313 = vpop.f32.mrb[0].mxu0
  %v314 = vadd.f32 %v246, %v313
  %v315 = vpop.f32.mrb[0].mxu0
  %316 = vmatprep.mubr.f32.mxu0 0.0
  %317 = vmatmul.mubr.f32.gmra.mrb[0].mxu0 %v224
  %v318 = vpop.f32.mrb[0].mxu0
  %v319 = vadd.f32 %v246, %v318
  %v320 = vpop.f32.mrb[0].mxu0
  %321 = vdwg.mxu0
  %v322 = vmul.f32 %v314, 0.01
  %v323 = vmul.f32 %v319, 0.01
  %v324 = vmax.f32 %v314, %v322
  %v325 = vmax.f32 %v319, %v323
  %s326 = scalar_lea.vmem %s2, 256
  %v327 = vld [vmem:[%s326] sm:$0xff]
  %v328 = vld [vmem:[%s326 + $0x8] sm:$0xff]
  %v329 = vld [vmem:[%s326 + $0x10] sm:$0xff]
  %v330 = vld [vmem:[%s326 + $0x18] sm:$0xff]
  %v331 = vld [vmem:[%s326 + $0x20] sm:$0xff]
  %v332 = vld [vmem:[%s326 + $0x28] sm:$0xff]
  %v333 = vld [vmem:[%s326 + $0x30] sm:$0xff]
  %v334 = vld [vmem:[%s326 + $0x38] sm:$0xff]
  %v335 = vld [vmem:[%s326 + $0x40] sm:$0xff]
  %v336 = vld [vmem:[%s326 + $0x48] sm:$0xff]
  %v337 = vld [vmem:[%s326 + $0x50] sm:$0xff]
  %v338 = vld [vmem:[%s326 + $0x58] sm:$0xff]
  %v339 = vld [vmem:[%s326 + $0x60] sm:$0xff]
  %v340 = vld [vmem:[%s326 + $0x68] sm:$0xff]
  %v341 = vld [vmem:[%s326 + $0x70] sm:$0xff]
  %v342 = vld [vmem:[%s326 + $0x78] sm:$0xff]
  %v343 = vld [vmem:[%s3 + $0x3] sm:$0x1]
  %v344 = vlaneseq
  %v345 = vshrl.u32 %v344, 7
  %v346 = vsub.s32 0, %v345
  %v347 = vrot.slane %v343, %v346
  %348 = vmatprep.subr.mxu0 0.0
  %349 = vmatpush1.msra.mxu0 %v327
  %350 = vmatprep.subr.mxu0 0.0
  %351 = vmatpush1.msra.mxu0 %v328
  %352 = vmatprep.subr.mxu0 0.0
  %353 = vmatpush1.msra.mxu0 %v329
  %354 = vmatprep.subr.mxu0 0.0
  %355 = vmatpush1.msra.mxu0 %v330
  %356 = vmatprep.subr.mxu0 0.0
  %357 = vmatpush1.msra.mxu0 %v331
  %358 = vmatprep.subr.mxu0 0.0
  %359 = vmatpush1.msra.mxu0 %v332
  %360 = vmatprep.subr.mxu0 0.0
  %361 = vmatpush1.msra.mxu0 %v333
  %362 = vmatprep.subr.mxu0 0.0
  %363 = vmatpush1.msra.mxu0 %v334
  %364 = vmatprep.subr.mxu0 0.0
  %365 = vmatpush1.msra.mxu0 %v335
  %366 = vmatprep.subr.mxu0 0.0
  %367 = vmatpush1.msra.mxu0 %v336
  %368 = vmatprep.subr.mxu0 0.0
  %369 = vmatpush1.msra.mxu0 %v337
  %370 = vmatprep.subr.mxu0 0.0
  %371 = vmatpush1.msra.mxu0 %v338
  %372 = vmatprep.subr.mxu0 0.0
  %373 = vmatpush1.msra.mxu0 %v339
  %374 = vmatprep.subr.mxu0 0.0
  %375 = vmatpush1.msra.mxu0 %v340
  %376 = vmatprep.subr.mxu0 0.0
  %377 = vmatpush1.msra.mxu0 %v341
  %378 = vmatprep.subr.mxu0 0.0
  %379 = vmatpush1.msra.mxu0 %v342
  %380 = vmatprep.subr.mxu0 0.0
  %381 = vmatpush1.msra.mxu0 0.0
  %382 = vmatprep.subr.mxu0 0.0
  %383 = vmatpush1.msra.mxu0 0.0
  %384 = vmatprep.subr.mxu0 0.0
  %385 = vmatpush1.msra.mxu0 0.0
  %386 = vmatprep.subr.mxu0 0.0
  %387 = vmatpush1.msra.mxu0 0.0
  %388 = vmatprep.subr.mxu0 0.0
  %389 = vmatpush1.msra.mxu0 0.0
  %390 = vmatprep.subr.mxu0 0.0
  %391 = vmatpush1.msra.mxu0 0.0
  %392 = vmatprep.subr.mxu0 0.0
  %393 = vmatpush1.msra.mxu0 0.0
  %394 = vmatprep.subr.mxu0 0.0
  %395 = vmatpush1.msra.mxu0 0.0
  %396 = vmatprep.subr.mxu0 0.0
  %397 = vmatpush1.msra.mxu0 0.0
  %398 = vmatprep.subr.mxu0 0.0
  %399 = vmatpush1.msra.mxu0 0.0
  %400 = vmatprep.subr.mxu0 0.0
  %401 = vmatpush1.msra.mxu0 0.0
  %402 = vmatprep.subr.mxu0 0.0
  %403 = vmatpush1.msra.mxu0 0.0
  %404 = vmatprep.subr.mxu0 0.0
  %405 = vmatpush1.msra.mxu0 0.0
  %406 = vmatprep.subr.mxu0 0.0
  %407 = vmatpush1.msra.mxu0 0.0
  %408 = vmatprep.subr.mxu0 0.0
  %409 = vmatpush1.msra.mxu0 0.0
  %410 = vmatprep.subr.mxu0 0.0
  %411 = vmatpush1.msra.mxu0 0.0
  %412 = vmatprep.mubr.f32.mxu0 0.0
  %413 = vmatmul.mubr.f32.gmra.mrb[0].mxu0 %v324
  %v414 = vpop.f32.mrb[0].mxu0
  %v415 = vadd.f32 %v347, %v414
  %v416 = vpop.f32.mrb[0].mxu0
  %417 = vmatprep.mubr.f32.mxu0 0.0
  %418 = vmatmul.mubr.f32.gmra.mrb[0].mxu0 %v325
  %v419 = vpop.f32.mrb[0].mxu0
  %v420 = vadd.f32 %v347, %v419
  %v421 = vpop.f32.mrb[0].mxu0
  %422 = vdwg.mxu0
  %v423 = vmul.f32 %v415, 0.01
  %v424 = vmul.f32 %v420, 0.01
  %v425 = vmax.f32 %v415, %v423
  %v426 = vmax.f32 %v420, %v424
  %s427 = scalar_lea.vmem %s2, 384
  %v428 = vld [vmem:[%s427] sm:$0xff]
  %v429 = vld [vmem:[%s427 + $0x8] sm:$0xff]
  %v430 = vld [vmem:[%s427 + $0x10] sm:$0xff]
  %v431 = vld [vmem:[%s427 + $0x18] sm:$0xff]
  %v432 = vld [vmem:[%s427 + $0x20] sm:$0xff]
  %v433 = vld [vmem:[%s427 + $0x28] sm:$0xff]
  %v434 = vld [vmem:[%s427 + $0x30] sm:$0xff]
  %v435 = vld [vmem:[%s427 + $0x38] sm:$0xff]
  %v436 = vld [vmem:[%s427 + $0x40] sm:$0xff]
  %v437 = vld [vmem:[%s427 + $0x48] sm:$0xff]
  %v438 = vld [vmem:[%s427 + $0x50] sm:$0xff]
  %v439 = vld [vmem:[%s427 + $0x58] sm:$0xff]
  %v440 = vld [vmem:[%s427 + $0x60] sm:$0xff]
  %v441 = vld [vmem:[%s427 + $0x68] sm:$0xff]
  %v442 = vld [vmem:[%s427 + $0x70] sm:$0xff]
  %v443 = vld [vmem:[%s427 + $0x78] sm:$0xff]
  %v444 = vld [vmem:[%s3 + $0x4] sm:$0x1]
  %v445 = vlaneseq
  %v446 = vshrl.u32 %v445, 7
  %v447 = vsub.s32 0, %v446
  %v448 = vrot.slane %v444, %v447
  %449 = vmatprep.subr.mxu0 0.0
  %450 = vmatpush1.msra.mxu0 %v428
  %451 = vmatprep.subr.mxu0 0.0
  %452 = vmatpush1.msra.mxu0 %v429
  %453 = vmatprep.subr.mxu0 0.0
  %454 = vmatpush1.msra.mxu0 %v430
  %455 = vmatprep.subr.mxu0 0.0
  %456 = vmatpush1.msra.mxu0 %v431
  %457 = vmatprep.subr.mxu0 0.0
  %458 = vmatpush1.msra.mxu0 %v432
  %459 = vmatprep.subr.mxu0 0.0
  %460 = vmatpush1.msra.mxu0 %v433
  %461 = vmatprep.subr.mxu0 0.0
  %462 = vmatpush1.msra.mxu0 %v434
  %463 = vmatprep.subr.mxu0 0.0
  %464 = vmatpush1.msra.mxu0 %v435
  %465 = vmatprep.subr.mxu0 0.0
  %466 = vmatpush1.msra.mxu0 %v436
  %467 = vmatprep.subr.mxu0 0.0
  %468 = vmatpush1.msra.mxu0 %v437
  %469 = vmatprep.subr.mxu0 0.0
  %470 = vmatpush1.msra.mxu0 %v438
  %471 = vmatprep.subr.mxu0 0.0
  %472 = vmatpush1.msra.mxu0 %v439
  %473 = vmatprep.subr.mxu0 0.0
  %474 = vmatpush1.msra.mxu0 %v440
  %475 = vmatprep.subr.mxu0 0.0
  %476 = vmatpush1.msra.mxu0 %v441
  %477 = vmatprep.subr.mxu0 0.0
  %478 = vmatpush1.msra.mxu0 %v442
  %479 = vmatprep.subr.mxu0 0.0
  %480 = vmatpush1.msra.mxu0 %v443
  %481 = vmatprep.subr.mxu0 0.0
  %482 = vmatpush1.msra.mxu0 0.0
  %483 = vmatprep.subr.mxu0 0.0
  %484 = vmatpush1.msra.mxu0 0.0
  %485 = vmatprep.subr.mxu0 0.0
  %486 = vmatpush1.msra.mxu0 0.0
  %487 = vmatprep.subr.mxu0 0.0
  %488 = vmatpush1.msra.mxu0 0.0
  %489 = vmatprep.subr.mxu0 0.0
  %490 = vmatpush1.msra.mxu0 0.0
  %491 = vmatprep.subr.mxu0 0.0
  %492 = vmatpush1.msra.mxu0 0.0
  %493 = vmatprep.subr.mxu0 0.0
  %494 = vmatpush1.msra.mxu0 0.0
  %495 = vmatprep.subr.mxu0 0.0
  %496 = vmatpush1.msra.mxu0 0.0
  %497 = vmatprep.subr.mxu0 0.0
  %498 = vmatpush1.msra.mxu0 0.0
  %499 = vmatprep.subr.mxu0 0.0
  %500 = vmatpush1.msra.mxu0 0.0
  %501 = vmatprep.subr.mxu0 0.0
  %502 = vmatpush1.msra.mxu0 0.0
  %503 = vmatprep.subr.mxu0 0.0
  %504 = vmatpush1.msra.mxu0 0.0
  %505 = vmatprep.subr.mxu0 0.0
  %506 = vmatpush1.msra.mxu0 0.0
  %507 = vmatprep.subr.mxu0 0.0
  %508 = vmatpush1.msra.mxu0 0.0
  %509 = vmatprep.subr.mxu0 0.0
  %510 = vmatpush1.msra.mxu0 0.0
  %511 = vmatprep.subr.mxu0 0.0
  %512 = vmatpush1.msra.mxu0 0.0
  %513 = vmatprep.mubr.f32.mxu0 0.0
  %514 = vmatmul.mubr.f32.gmra.mrb[0].mxu0 %v425
  %v515 = vpop.f32.mrb[0].mxu0
  %v516 = vadd.f32 %v448, %v515
  %v517 = vpop.f32.mrb[0].mxu0
  %518 = vmatprep.mubr.f32.mxu0 0.0
  %519 = vmatmul.mubr.f32.gmra.mrb[0].mxu0 %v426
  %v520 = vpop.f32.mrb[0].mxu0
  %v521 = vadd.f32 %v448, %v520
  %v522 = vpop.f32.mrb[0].mxu0
  %523 = vdwg.mxu0
  %v524 = vmul.f32 %v516, 0.01
  %v525 = vmul.f32 %v521, 0.01
  %v526 = vmax.f32 %v516, %v524
  %v527 = vmax.f32 %v521, %v525
  %s528 = scalar_lea.vmem %s2, 512
  %v529 = vld [vmem:[%s528] sm:$0xff]
  %v530 = vld [vmem:[%s528 + $0x8] sm:$0xff]
  %v531 = vld [vmem:[%s528 + $0x10] sm:$0xff]
  %v532 = vld [vmem:[%s528 + $0x18] sm:$0xff]
  %v533 = vld [vmem:[%s528 + $0x20] sm:$0xff]
  %v534 = vld [vmem:[%s528 + $0x28] sm:$0xff]
  %v535 = vld [vmem:[%s528 + $0x30] sm:$0xff]
  %v536 = vld [vmem:[%s528 + $0x38] sm:$0xff]
  %v537 = vld [vmem:[%s528 + $0x40] sm:$0xff]
  %v538 = vld [vmem:[%s528 + $0x48] sm:$0xff]
  %v539 = vld [vmem:[%s528 + $0x50] sm:$0xff]
  %v540 = vld [vmem:[%s528 + $0x58] sm:$0xff]
  %v541 = vld [vmem:[%s528 + $0x60] sm:$0xff]
  %v542 = vld [vmem:[%s528 + $0x68] sm:$0xff]
  %v543 = vld [vmem:[%s528 + $0x70] sm:$0xff]
  %v544 = vld [vmem:[%s528 + $0x78] sm:$0xff]
  %v545 = vld [vmem:[%s3 + $0x5] sm:$0x1]
  %v546 = vlaneseq
  %v547 = vshrl.u32 %v546, 7
  %v548 = vsub.s32 0, %v547
  %v549 = vrot.slane %v545, %v548
  %550 = vmatprep.subr.mxu0 0.0
  %551 = vmatpush1.msra.mxu0 %v529
  %552 = vmatprep.subr.mxu0 0.0
  %553 = vmatpush1.msra.mxu0 %v530
  %554 = vmatprep.subr.mxu0 0.0
  %555 = vmatpush1.msra.mxu0 %v531
  %556 = vmatprep.subr.mxu0 0.0
  %557 = vmatpush1.msra.mxu0 %v532
  %558 = vmatprep.subr.mxu0 0.0
  %559 = vmatpush1.msra.mxu0 %v533
  %560 = vmatprep.subr.mxu0 0.0
  %561 = vmatpush1.msra.mxu0 %v534
  %562 = vmatprep.subr.mxu0 0.0
  %563 = vmatpush1.msra.mxu0 %v535
  %564 = vmatprep.subr.mxu0 0.0
  %565 = vmatpush1.msra.mxu0 %v536
  %566 = vmatprep.subr.mxu0 0.0
  %567 = vmatpush1.msra.mxu0 %v537
  %568 = vmatprep.subr.mxu0 0.0
  %569 = vmatpush1.msra.mxu0 %v538
  %570 = vmatprep.subr.mxu0 0.0
  %571 = vmatpush1.msra.mxu0 %v539
  %572 = vmatprep.subr.mxu0 0.0
  %573 = vmatpush1.msra.mxu0 %v540
  %574 = vmatprep.subr.mxu0 0.0
  %575 = vmatpush1.msra.mxu0 %v541
  %576 = vmatprep.subr.mxu0 0.0
  %577 = vmatpush1.msra.mxu0 %v542
  %578 = vmatprep.subr.mxu0 0.0
  %579 = vmatpush1.msra.mxu0 %v543
  %580 = vmatprep.subr.mxu0 0.0
  %581 = vmatpush1.msra.mxu0 %v544
  %582 = vmatprep.subr.mxu0 0.0
  %583 = vmatpush1.msra.mxu0 0.0
  %584 = vmatprep.subr.mxu0 0.0
  %585 = vmatpush1.msra.mxu0 0.0
  %586 = vmatprep.subr.mxu0 0.0
  %587 = vmatpush1.msra.mxu0 0.0
  %588 = vmatprep.subr.mxu0 0.0
  %589 = vmatpush1.msra.mxu0 0.0
  %590 = vmatprep.subr.mxu0 0.0
  %591 = vmatpush1.msra.mxu0 0.0
  %592 = vmatprep.subr.mxu0 0.0
  %593 = vmatpush1.msra.mxu0 0.0
  %594 = vmatprep.subr.mxu0 0.0
  %595 = vmatpush1.msra.mxu0 0.0
  %596 = vmatprep.subr.mxu0 0.0
  %597 = vmatpush1.msra.mxu0 0.0
  %598 = vmatprep.subr.mxu0 0.0
  %599 = vmatpush1.msra.mxu0 0.0
  %600 = vmatprep.subr.mxu0 0.0
  %601 = vmatpush1.msra.mxu0 0.0
  %602 = vmatprep.subr.mxu0 0.0
  %603 = vmatpush1.msra.mxu0 0.0
  %604 = vmatprep.subr.mxu0 0.0
  %605 = vmatpush1.msra.mxu0 0.0
  %606 = vmatprep.subr.mxu0 0.0
  %607 = vmatpush1.msra.mxu0 0.0
  %608 = vmatprep.subr.mxu0 0.0
  %609 = vmatpush1.msra.mxu0 0.0
  %610 = vmatprep.subr.mxu0 0.0
  %611 = vmatpush1.msra.mxu0 0.0
  %612 = vmatprep.subr.mxu0 0.0
  %613 = vmatpush1.msra.mxu0 0.0
  %614 = vmatprep.mubr.f32.mxu0 0.0
  %615 = vmatmul.mubr.f32.gmra.mrb[0].mxu0 %v526
  %v616 = vpop.f32.mrb[0].mxu0
  %v617 = vadd.f32 %v549, %v616
  %v618 = vpop.f32.mrb[0].mxu0
  %619 = vmatprep.mubr.f32.mxu0 0.0
  %620 = vmatmul.mubr.f32.gmra.mrb[0].mxu0 %v527
  %v621 = vpop.f32.mrb[0].mxu0
  %v622 = vadd.f32 %v549, %v621
  %v623 = vpop.f32.mrb[0].mxu0
  %624 = vdwg.mxu0
  %v625 = vmul.f32 %v617, 0.01
  %v626 = vmul.f32 %v622, 0.01
  %v627 = vmax.f32 %v617, %v625
  %v628 = vmax.f32 %v622, %v626
  %s629 = scalar_lea.vmem %s2, 640
  %v630 = vld [vmem:[%s629] sm:$0xff]
  %v631 = vld [vmem:[%s629 + $0x8] sm:$0xff]
  %v632 = vld [vmem:[%s629 + $0x10] sm:$0xff]
  %v633 = vld [vmem:[%s629 + $0x18] sm:$0xff]
  %v634 = vld [vmem:[%s629 + $0x20] sm:$0xff]
  %v635 = vld [vmem:[%s629 + $0x28] sm:$0xff]
  %v636 = vld [vmem:[%s629 + $0x30] sm:$0xff]
  %v637 = vld [vmem:[%s629 + $0x38] sm:$0xff]
  %v638 = vld [vmem:[%s629 + $0x40] sm:$0xff]
  %v639 = vld [vmem:[%s629 + $0x48] sm:$0xff]
  %v640 = vld [vmem:[%s629 + $0x50] sm:$0xff]
  %v641 = vld [vmem:[%s629 + $0x58] sm:$0xff]
  %v642 = vld [vmem:[%s629 + $0x60] sm:$0xff]
  %v643 = vld [vmem:[%s629 + $0x68] sm:$0xff]
  %v644 = vld [vmem:[%s629 + $0x70] sm:$0xff]
  %v645 = vld [vmem:[%s629 + $0x78] sm:$0xff]
  %v646 = vld [vmem:[%s3 + $0x6] sm:$0x1]
  %v647 = vlaneseq
  %v648 = vshrl.u32 %v647, 7
  %v649 = vsub.s32 0, %v648
  %v650 = vrot.slane %v646, %v649
  %651 = vmatprep.subr.mxu0 0.0
  %652 = vmatpush1.msra.mxu0 %v630
  %653 = vmatprep.subr.mxu0 0.0
  %654 = vmatpush1.msra.mxu0 %v631
  %655 = vmatprep.subr.mxu0 0.0
  %656 = vmatpush1.msra.mxu0 %v632
  %657 = vmatprep.subr.mxu0 0.0
  %658 = vmatpush1.msra.mxu0 %v633
  %659 = vmatprep.subr.mxu0 0.0
  %660 = vmatpush1.msra.mxu0 %v634
  %661 = vmatprep.subr.mxu0 0.0
  %662 = vmatpush1.msra.mxu0 %v635
  %663 = vmatprep.subr.mxu0 0.0
  %664 = vmatpush1.msra.mxu0 %v636
  %665 = vmatprep.subr.mxu0 0.0
  %666 = vmatpush1.msra.mxu0 %v637
  %667 = vmatprep.subr.mxu0 0.0
  %668 = vmatpush1.msra.mxu0 %v638
  %669 = vmatprep.subr.mxu0 0.0
  %670 = vmatpush1.msra.mxu0 %v639
  %671 = vmatprep.subr.mxu0 0.0
  %672 = vmatpush1.msra.mxu0 %v640
  %673 = vmatprep.subr.mxu0 0.0
  %674 = vmatpush1.msra.mxu0 %v641
  %675 = vmatprep.subr.mxu0 0.0
  %676 = vmatpush1.msra.mxu0 %v642
  %677 = vmatprep.subr.mxu0 0.0
  %678 = vmatpush1.msra.mxu0 %v643
  %679 = vmatprep.subr.mxu0 0.0
  %680 = vmatpush1.msra.mxu0 %v644
  %681 = vmatprep.subr.mxu0 0.0
  %682 = vmatpush1.msra.mxu0 %v645
  %683 = vmatprep.subr.mxu0 0.0
  %684 = vmatpush1.msra.mxu0 0.0
  %685 = vmatprep.subr.mxu0 0.0
  %686 = vmatpush1.msra.mxu0 0.0
  %687 = vmatprep.subr.mxu0 0.0
  %688 = vmatpush1.msra.mxu0 0.0
  %689 = vmatprep.subr.mxu0 0.0
  %690 = vmatpush1.msra.mxu0 0.0
  %691 = vmatprep.subr.mxu0 0.0
  %692 = vmatpush1.msra.mxu0 0.0
  %693 = vmatprep.subr.mxu0 0.0
  %694 = vmatpush1.msra.mxu0 0.0
  %695 = vmatprep.subr.mxu0 0.0
  %696 = vmatpush1.msra.mxu0 0.0
  %697 = vmatprep.subr.mxu0 0.0
  %698 = vmatpush1.msra.mxu0 0.0
  %699 = vmatprep.subr.mxu0 0.0
  %700 = vmatpush1.msra.mxu0 0.0
  %701 = vmatprep.subr.mxu0 0.0
  %702 = vmatpush1.msra.mxu0 0.0
  %703 = vmatprep.subr.mxu0 0.0
  %704 = vmatpush1.msra.mxu0 0.0
  %705 = vmatprep.subr.mxu0 0.0
  %706 = vmatpush1.msra.mxu0 0.0
  %707 = vmatprep.subr.mxu0 0.0
  %708 = vmatpush1.msra.mxu0 0.0
  %709 = vmatprep.subr.mxu0 0.0
  %710 = vmatpush1.msra.mxu0 0.0
  %711 = vmatprep.subr.mxu0 0.0
  %712 = vmatpush1.msra.mxu0 0.0
  %713 = vmatprep.subr.mxu0 0.0
  %714 = vmatpush1.msra.mxu0 0.0
  %715 = vmatprep.mubr.f32.mxu0 0.0
  %716 = vmatmul.mubr.f32.gmra.mrb[0].mxu0 %v627
  %v717 = vpop.f32.mrb[0].mxu0
  %v718 = vadd.f32 %v650, %v717
  %v719 = vpop.f32.mrb[0].mxu0
  %720 = vmatprep.mubr.f32.mxu0 0.0
  %721 = vmatmul.mubr.f32.gmra.mrb[0].mxu0 %v628
  %v722 = vpop.f32.mrb[0].mxu0
  %v723 = vadd.f32 %v650, %v722
  %v724 = vpop.f32.mrb[0].mxu0
  %725 = vdwg.mxu0
  %v726 = vmul.f32 %v718, 0.01
  %v727 = vmul.f32 %v723, 0.01
  %v728 = vmax.f32 %v718, %v726
  %v729 = vmax.f32 %v723, %v727
  %s730 = scalar_lea.vmem %s2, 768
  %v731 = vld [vmem:[%s730] sm:$0xff]
  %v732 = vld [vmem:[%s730 + $0x8] sm:$0xff]
  %v733 = vld [vmem:[%s730 + $0x10] sm:$0xff]
  %v734 = vld [vmem:[%s730 + $0x18] sm:$0xff]
  %v735 = vld [vmem:[%s730 + $0x20] sm:$0xff]
  %v736 = vld [vmem:[%s730 + $0x28] sm:$0xff]
  %v737 = vld [vmem:[%s730 + $0x30] sm:$0xff]
  %v738 = vld [vmem:[%s730 + $0x38] sm:$0xff]
  %v739 = vld [vmem:[%s730 + $0x40] sm:$0xff]
  %v740 = vld [vmem:[%s730 + $0x48] sm:$0xff]
  %v741 = vld [vmem:[%s730 + $0x50] sm:$0xff]
  %v742 = vld [vmem:[%s730 + $0x58] sm:$0xff]
  %v743 = vld [vmem:[%s730 + $0x60] sm:$0xff]
  %v744 = vld [vmem:[%s730 + $0x68] sm:$0xff]
  %v745 = vld [vmem:[%s730 + $0x70] sm:$0xff]
  %v746 = vld [vmem:[%s730 + $0x78] sm:$0xff]
  %v747 = vld [vmem:[%s3 + $0x7] sm:$0x1]
  %v748 = vlaneseq
  %v749 = vshrl.u32 %v748, 7
  %v750 = vsub.s32 0, %v749
  %v751 = vrot.slane %v747, %v750
  %752 = vmatprep.subr.mxu0 0.0
  %753 = vmatpush1.msra.mxu0 %v731
  %754 = vmatprep.subr.mxu0 0.0
  %755 = vmatpush1.msra.mxu0 %v732
  %756 = vmatprep.subr.mxu0 0.0
  %757 = vmatpush1.msra.mxu0 %v733
  %758 = vmatprep.subr.mxu0 0.0
  %759 = vmatpush1.msra.mxu0 %v734
  %760 = vmatprep.subr.mxu0 0.0
  %761 = vmatpush1.msra.mxu0 %v735
  %762 = vmatprep.subr.mxu0 0.0
  %763 = vmatpush1.msra.mxu0 %v736
  %764 = vmatprep.subr.mxu0 0.0
  %765 = vmatpush1.msra.mxu0 %v737
  %766 = vmatprep.subr.mxu0 0.0
  %767 = vmatpush1.msra.mxu0 %v738
  %768 = vmatprep.subr.mxu0 0.0
  %769 = vmatpush1.msra.mxu0 %v739
  %770 = vmatprep.subr.mxu0 0.0
  %771 = vmatpush1.msra.mxu0 %v740
  %772 = vmatprep.subr.mxu0 0.0
  %773 = vmatpush1.msra.mxu0 %v741
  %774 = vmatprep.subr.mxu0 0.0
  %775 = vmatpush1.msra.mxu0 %v742
  %776 = vmatprep.subr.mxu0 0.0
  %777 = vmatpush1.msra.mxu0 %v743
  %778 = vmatprep.subr.mxu0 0.0
  %779 = vmatpush1.msra.mxu0 %v744
  %780 = vmatprep.subr.mxu0 0.0
  %781 = vmatpush1.msra.mxu0 %v745
  %782 = vmatprep.subr.mxu0 0.0
  %783 = vmatpush1.msra.mxu0 %v746
  %784 = vmatprep.subr.mxu0 0.0
  %785 = vmatpush1.msra.mxu0 0.0
  %786 = vmatprep.subr.mxu0 0.0
  %787 = vmatpush1.msra.mxu0 0.0
  %788 = vmatprep.subr.mxu0 0.0
  %789 = vmatpush1.msra.mxu0 0.0
  %790 = vmatprep.subr.mxu0 0.0
  %791 = vmatpush1.msra.mxu0 0.0
  %792 = vmatprep.subr.mxu0 0.0
  %793 = vmatpush1.msra.mxu0 0.0
  %794 = vmatprep.subr.mxu0 0.0
  %795 = vmatpush1.msra.mxu0 0.0
  %796 = vmatprep.subr.mxu0 0.0
  %797 = vmatpush1.msra.mxu0 0.0
  %798 = vmatprep.subr.mxu0 0.0
  %799 = vmatpush1.msra.mxu0 0.0
  %800 = vmatprep.subr.mxu0 0.0
  %801 = vmatpush1.msra.mxu0 0.0
  %802 = vmatprep.subr.mxu0 0.0
  %803 = vmatpush1.msra.mxu0 0.0
  %804 = vmatprep.subr.mxu0 0.0
  %805 = vmatpush1.msra.mxu0 0.0
  %806 = vmatprep.subr.mxu0 0.0
  %807 = vmatpush1.msra.mxu0 0.0
  %808 = vmatprep.subr.mxu0 0.0
  %809 = vmatpush1.msra.mxu0 0.0
  %810 = vmatprep.subr.mxu0 0.0
  %811 = vmatpush1.msra.mxu0 0.0
  %812 = vmatprep.subr.mxu0 0.0
  %813 = vmatpush1.msra.mxu0 0.0
  %814 = vmatprep.subr.mxu0 0.0
  %815 = vmatpush1.msra.mxu0 0.0
  %816 = vmatprep.mubr.f32.mxu0 0.0
  %817 = vmatmul.mubr.f32.gmra.mrb[0].mxu0 %v728
  %v818 = vpop.f32.mrb[0].mxu0
  %v819 = vadd.f32 %v751, %v818
  %v820 = vpop.f32.mrb[0].mxu0
  %821 = vmatprep.mubr.f32.mxu0 0.0
  %822 = vmatmul.mubr.f32.gmra.mrb[0].mxu0 %v729
  %v823 = vpop.f32.mrb[0].mxu0
  %v824 = vadd.f32 %v751, %v823
  %v825 = vpop.f32.mrb[0].mxu0
  %826 = vdwg.mxu0
  %827 = vst [vmem:[%s4] sm:$0xff] %v819
  %828 = vst [vmem:[%s4 + $0x8] sm:$0xff] %v824
  %831 = vrot.lane.b32.xlu0 %v425, 84
  %v832 = vpop.permute.xlu0 %831
  %833 = vrot.lane.b32.xlu0 %v426, 84
  %v834 = vpop.permute.xlu0 %833
  %vm837 = vcmask 736928
  %838 = vst.msk [vmem:[%s4] sm:$0xff] %vm837, %v832
  %839 = vst.msk [vmem:[%s4 + $0x8] sm:$0xff] %vm837, %v834
  // Predicated region
  $region18: #{ae_forward.1} parent=0 // pred_check
    _
  $region19: #{ae_forward.1} parent=0 // pred_check_branch
    %841 = sbr.rel (0) target = $region21
  $region20: #{ae_forward.1} parent=0 // pred_region
    _
  $region21: #{ae_forward.1} parent=0 // pred_fallthru
    _
  // Predicated region
  $region22: #{ae_forward.1} parent=0 // pred_check
    _
  $region23: #{ae_forward.1} parent=0 // pred_check_branch
    %843 = sbr.rel (0) target = $region25
  $region24: #{ae_forward.1} parent=0 // pred_region
    _
  $region25: #{ae_forward.1} parent=0 // pred_fallthru
    _

</llo_original>
